<compile_context>
chip_gen: v7x
topology: tpu7x:2x2x1
jax: 0.10.0
libtpu: 0.0.40
codegen_flags: <defaults>
</compile_context>

<pallas_src>
import jax
import jax.numpy as jnp
from jax.experimental import pallas as pl
from jax.experimental.pallas import tpu as pltpu

_LANES = 128


# ----------------------------------------------------------------------------
# The concrete lambda (plain-JAX form; also the tiny / unaligned / non-float
# fallback path)
# ----------------------------------------------------------------------------
def _lambda_fn(x):
    return x * 2.0 + 1.0


# ----------------------------------------------------------------------------
# Pallas kernel: elementwise lambda  y = x * 2.0 + 1.0  on one (tr, 128) tile
# ----------------------------------------------------------------------------
def _lambda_kernel(x_ref, o_ref):
    o_ref[...] = x_ref[...] * 2.0 + 1.0


def _sublane_mult(dtype) -> int:
    """Native sublane multiple for the dtype's packed (sub, 128) tile."""
    itemsize = jnp.dtype(dtype).itemsize
    if itemsize >= 4:
        return 8
    if itemsize == 2:
        return 16
    return 32  # 1-byte dtypes


def _pick_tile_rows(R: int, itemsize: int, sub_mult: int) -> int:
    """Pick tile rows: ~2 MiB tiles, >= ~1 MiB, and a long (and, when short,
    even) grid so the pipeline reaches steady state and both v7x TCs are used."""
    lane_bytes = _LANES * itemsize
    target_rows = max(sub_mult, (2 * 1024 * 1024) // lane_bytes)  # ~2 MiB tile
    min_rows = max(sub_mult, (1 * 1024 * 1024) // lane_bytes)     # >= ~1 MiB tile

    tr = min(R, target_rows)
    # Favor >= ~8 grid steps for mid-sized inputs (keeps tiles >= ~1 MiB).
    if R // 8 >= min_rows:
        tr = min(tr, R // 8)
    # Round down to the dtype's native sublane multiple (never below it).
    tr = max(sub_mult, (tr // sub_mult) * sub_mult)

    # Short odd grids leave one v7x TensorCore idle for a whole step; shrink
    # the tile a little until the step count is even (static Python search).
    steps = -(-R // tr)
    if 1 < steps <= 8 and steps % 2 == 1:
        floor_rows = max(sub_mult, min_rows // 2)
        t = tr - sub_mult
        while t >= floor_rows:
            if (-(-R // t)) % 2 == 0:
                tr = t
                break
            t -= sub_mult
    return tr


def _lambda_2d(x2d: jax.Array) -> jax.Array:
    """Apply the lambda to a lane-dense (R, 128) slab with a 1-D row grid."""
    R, C = x2d.shape
    assert C == _LANES
    itemsize = jnp.dtype(x2d.dtype).itemsize
    sub_mult = _sublane_mult(x2d.dtype)
    assert R % sub_mult == 0

    tr = _pick_tile_rows(R, itemsize, sub_mult)
    tile_bytes = tr * C * itemsize
    # Input + output, each double-buffered => ~4 x tile_bytes, plus headroom.
    # Floor 16 MiB, cap 32 MiB: safe per-TC on v7x, trivially safe on v5e/v6e.
    vmem_limit = int(min(32 * 1024 * 1024,
                         max(16 * 1024 * 1024, 4 * tile_bytes + 4 * 1024 * 1024)))

    return pl.pallas_call(
        _lambda_kernel,
        out_shape=jax.ShapeDtypeStruct((R, C), x2d.dtype),
        grid_spec=pltpu.PrefetchScalarGridSpec(
            num_scalar_prefetch=0,
            grid=(pl.cdiv(R, tr),),
            in_specs=[pl.BlockSpec((tr, C), lambda i: (i, 0))],
            out_specs=pl.BlockSpec((tr, C), lambda i: (i, 0)),
        ),
        compiler_params=pltpu.CompilerParams(
            dimension_semantics=("parallel",),
            vmem_limit_bytes=vmem_limit,
        ),
    )(x2d)


def lambda_module_forward(x: jax.Array,
                          *,
                          min_pallas_elements: int = 2 * 1024 * 1024) -> jax.Array:
    """Equivalent of LambdaModule(lambda x: x * 2.0 + 1.0).forward(x).

    Elementwise; output shape/dtype match the (floating-point) input.  Any
    input shape is accepted (reference usage is NCHW).
    """
    if not jnp.issubdtype(x.dtype, jnp.floating):
        # Integer/bool inputs: keep plain-JAX promotion semantics; the Pallas
        # path would declare an integer out dtype for a float computation.
        return _lambda_fn(x)

    sub_mult = _sublane_mult(x.dtype)
    align = sub_mult * _LANES
    n = x.size

    # Tiny or unaligned tensors: the fused XLA elementwise op is already at
    # the HBM roofline; Pallas would only add launch cost / extra HBM passes.
    if n < max(min_pallas_elements, align) or n % align != 0:
        return _lambda_fn(x)

    orig_shape = x.shape
    y = _lambda_2d(jnp.ravel(x).reshape(n // _LANES, _LANES))
    return y.reshape(orig_shape)


if __name__ == "__main__":
    key = jax.random.PRNGKey(0)
    k1, k2, k3, k4 = jax.random.split(key, 4)

    # 1) Small NCHW input consistent with typical LambdaModule usage in Loci
    #    -> fused-XLA fast path by default.
    x = jax.random.normal(k1, (2, 4, 16, 16), dtype=jnp.float32)
    y_ref = x * 2.0 + 1.0
    y = lambda_module_forward(x)
    jax.block_until_ready(y)
    assert y.shape == x.shape and y.dtype == x.dtype
    assert jnp.allclose(y, y_ref, atol=1e-6, rtol=1e-6)

    # 2) Force the Pallas kernel on the same small, aligned input to verify it
    #    compiles and runs on TPU.
    y_pallas = lambda_module_forward(x, min_pallas_elements=0)
    jax.block_until_ready(y_pallas)
    assert jnp.allclose(y_pallas, y_ref, atol=1e-6, rtol=1e-6)

    # 3) Medium aligned f32 input: exercises the multi-step pipelined grid.
    xm = jax.random.normal(k2, (8, 32, 64, 64), dtype=jnp.float32)
    ym = lambda_module_forward(xm, min_pallas_elements=0)
    jax.block_until_ready(ym)
    assert jnp.allclose(ym, xm * 2.0 + 1.0, atol=1e-6, rtol=1e-6)

    # 4) bf16 aligned input: packed (16, 128) tiling path.
    xb = jax.random.normal(k3, (2, 4, 16, 16), dtype=jnp.bfloat16)
    yb = lambda_module_forward(xb, min_pallas_elements=0)
    jax.block_until_ready(yb)
    assert yb.dtype == jnp.bfloat16
    assert jnp.allclose(yb.astype(jnp.float32),
                        xb.astype(jnp.float32) * 2.0 + 1.0,
                        atol=1e-1, rtol=2e-2)

    # 5) Unaligned element count -> plain fused-XLA fallback (no extra passes).
    x2 = jax.random.normal(k4, (3, 5, 17, 9), dtype=jnp.float32)
    y2 = lambda_module_forward(x2, min_pallas_elements=0)
    jax.block_until_ready(y2)
    assert jnp.allclose(y2, x2 * 2.0 + 1.0, atol=1e-6, rtol=1e-6)

    print("KERNEL_OK")
</pallas_src>

<mosaic_0001>
module attributes {stable_mosaic.version = 11 : i64} {
  func.func @_lambda_kernel(%arg0: i32, %arg1: memref<16x128xf32, #tpu.memory_space<vmem>>, %arg2: memref<16x128xf32, #tpu.memory_space<vmem>>) attributes {dimension_semantics = [#tpu.dimension_semantics<parallel>], iteration_bounds = array<i64: 1>, scalar_prefetch = 0 : i64, scratch_operands = 0 : i64, tpu.core_type = #tpu.core_type<tc>, window_params = [{transform_indices = @transform_0, window_bounds = array<i64: 16, 128>}, {transform_indices = @transform_1, window_bounds = array<i64: 16, 128>}]} {
    %c0 = arith.constant 0 : index
    %c0_0 = arith.constant 0 : index
    %0 = vector.load %arg1[%c0, %c0_0] : memref<16x128xf32, #tpu.memory_space<vmem>>, vector<16x128xf32>
    %cst = arith.constant 2.000000e+00 : f32
    %1 = vector.broadcast %cst : f32 to vector<16x128xf32>
    %2 = arith.mulf %0, %1 : vector<16x128xf32>
    %cst_1 = arith.constant 1.000000e+00 : f32
    %3 = vector.broadcast %cst_1 : f32 to vector<16x128xf32>
    %4 = arith.addf %2, %3 : vector<16x128xf32>
    %c0_2 = arith.constant 0 : index
    %c0_3 = arith.constant 0 : index
    %5 = vector.load %arg2[%c0_2, %c0_3] : memref<16x128xf32, #tpu.memory_space<vmem>>, vector<16x128xf32>
    tpu.vector_store %arg2[%c0_2, %c0_3], %4 {strides = array<i32>} : memref<16x128xf32, #tpu.memory_space<vmem>>, vector<16x128xf32>,
    return
  }
  func.func @transform_0(%arg0: i32) -> (i32, i32) {
    %c0_i32 = arith.constant 0 : i32
    %c0_i32_0 = arith.constant 0 : i32
    return %arg0, %c0_i32 : i32, i32
  }
  func.func @transform_1(%arg0: i32) -> (i32, i32) {
    %c0_i32 = arith.constant 0 : i32
    %c0_i32_0 = arith.constant 0 : i32
    return %arg0, %c0_i32 : i32, i32
  }
}

</mosaic_0001>

<llo_original>
// kernel: tpu_custom_call.1
$region0: #{tpu_custom_call.1}
  #allocation0 [shape = 'u32[]', space=smem, size = 0x4, offset = 0x4, fixed_abs, tag = 'smem constant byte address 0x4 - core index']
  #allocation1 [shape = 'u32[144,128]{1,0:T(1,128)}', space=vmem, size = 0x12000, scoped, tag = 'internal scratch']
  %s0 = inlined_call_operand.hbm [shape: f32[16,128], index: 0, kind: input, shape index: {}]
  %s1 = inlined_call_operand.hbm [shape: f32[16,128], index: 1, kind: output, shape index: {}]
  %s2 = sld [smem:[#allocation0]]
  $region18: #{tpu_custom_call.1} parent=0
    _
  %s4 = ssub.s32 1, %s2
  %s5 = scalar_select 0, %s4, %s2
  $region1: #{tpu_custom_call.1} parent=0
    #allocation2 [shape = 'u8[8192]{0}', space=vmem, size = 0x2000, scoped, tag = 'input window, operand 0, single buffered']
    #allocation3 [shape = 's32[1]{0}', space=sflag, size = 0x4, scoped, tag = 'scoped memory for tpu_custom_call.1']
    #allocation4 [shape = 's32[1]{0}', space=sflag, size = 0x4, scoped, tag = 'scoped memory for tpu_custom_call.1']
    #allocation5 [shape = 'u8[8192]{0}', space=vmem, size = 0x2000, scoped, tag = 'output window, operand 0, single buffered']
    %6 = vsyncpa [#allocation3], 0
    %7 = vsyncpa [#allocation4], 0
    // Predicated region
    $region2: #{tpu_custom_call.1} parent=1 // pred_check
      _
    $region3: #{tpu_custom_call.1} parent=1 // pred_check_branch
      %9 = sbr.rel (0) target = $region5
    $region4: #{tpu_custom_call.1} parent=1 // pred_region
      %s11 = ssub.s32 256, 256
      %12 = vsyncadd [#allocation3], %s11
      %s13 = sshll.u32 [#allocation2], 4
      %s14 = int_to_ptr.vmem [resolvable:$true] %s13
      %19 = dma.hbm_to_vmem [thread:$0]  %s0, 256, %s14, [#allocation3], 128, 128, 8
    $region5: #{tpu_custom_call.1} parent=1 // pred_fallthru
      _
    // Predicated region
    $region6: #{tpu_custom_call.1} parent=1 // pred_check
      _
    $region7: #{tpu_custom_call.1} parent=1 // pred_check_branch
      %21 = sbr.rel (0) target = $region9
    $region8: #{tpu_custom_call.1} parent=1 // pred_region
      %22 = dma.done [#allocation3], 256
    $region9: #{tpu_custom_call.1} parent=1 // pred_fallthru
      _
    %v23 = vld [vmem:[#allocation2] sm:$0xff]
    %v24 = vld [vmem:[#allocation2 + $0x8] sm:$0xff]
    %v25 = vmul.f32 %v23, 2.0
    %v26 = vmul.f32 %v24, 2.0
    %v27 = vadd.f32 %v25, 1.0
    %v28 = vadd.f32 %v26, 1.0
    %29 = vst [vmem:[#allocation5] sm:$0xff] %v27
    %30 = vst [vmem:[#allocation5 + $0x8] sm:$0xff] %v28
    // Predicated region
    $region10: #{tpu_custom_call.1} parent=1 // pred_check
      _
    $region11: #{tpu_custom_call.1} parent=1 // pred_check_branch
      %32 = sbr.rel (0) target = $region13
    $region12: #{tpu_custom_call.1} parent=1 // pred_region
      %s34 = ssub.s32 256, 256
      %35 = vsyncadd [#allocation4], %s34
      %s36 = sshll.u32 [#allocation5], 4
      %s37 = int_to_ptr.vmem [resolvable:$true] %s36
      %42 = dma.vmem_to_hbm [thread:$0]  %s37, 256, %s1, [#allocation4], 128, 128, 8
    $region13: #{tpu_custom_call.1} parent=1 // pred_fallthru
      _
    // Predicated region
    $region14: #{tpu_custom_call.1} parent=1 // pred_check
      _
    $region15: #{tpu_custom_call.1} parent=1 // pred_check_branch
      %44 = sbr.rel (0) target = $region17
    $region16: #{tpu_custom_call.1} parent=1 // pred_region
      %45 = dma.done [#allocation4], 256
    $region17: #{tpu_custom_call.1} parent=1 // pred_fallthru
      _
    %46 = vsyncpa [#allocation3], 1
    %47 = vsyncpa [#allocation4], 1

</llo_original>
